<compile_context>
chip_gen: v7x
topology: tpu7x:2x2x1
jax: 0.10.0
libtpu: 0.0.40
codegen_flags: <defaults>
</compile_context>

<pallas_src>
import functools
import math

import jax
import jax.numpy as jnp
from jax import lax
from jax.experimental import pallas as pl
from jax.experimental.pallas import tpu as pltpu


def _gelu_exact(x):
    # nn.GELU() default (approximate='none'): 0.5 * x * (1 + erf(x / sqrt(2)))
    return 0.5 * x * (1.0 + lax.erf(x * (1.0 / math.sqrt(2.0))))


def _gelu_tanh(x):
    # nn.GELU(approximate='tanh'); runs on the EUP (otherwise idle slot here).
    c = math.sqrt(2.0 / math.pi)
    return 0.5 * x * (1.0 + jnp.tanh(c * (x + 0.044715 * x * x * x)))


def _mlp_kernel(x_ref, w1_ref, b1_ref, w2_ref, b2_ref, w3_ref, b3_ref, o_ref,
                *, approximate_gelu):
    act = _gelu_tanh if approximate_gelu else _gelu_exact

    x = x_ref[...]  # (tm, Kp) in compute dtype (f32 or bf16)

    # Layer 1: MXU accumulates in f32; bias + GELU in f32.
    h = jnp.dot(x, w1_ref[...], preferred_element_type=jnp.float32) + b1_ref[...]
    h = act(h)

    # Layer 2
    h = jnp.dot(h.astype(w2_ref.dtype), w2_ref[...],
                preferred_element_type=jnp.float32) + b2_ref[...]
    h = act(h)

    # Layer 3
    y = jnp.dot(h.astype(w3_ref.dtype), w3_ref[...],
                preferred_element_type=jnp.float32) + b3_ref[...]
    o_ref[...] = y.astype(o_ref.dtype)


def _round_up(n, m):
    return ((n + m - 1) // m) * m


def _pad2d(a, rows, cols):
    r, c = a.shape
    if r == rows and c == cols:
        return a
    return jnp.pad(a, ((0, rows - r), (0, cols - c)))


def large_molecule_encoder(x, params, *, tm=None, compute_dtype=jnp.float32,
                           approximate_gelu=False, lane=128):
    """x: (B, input_dim). params: dict of transposed weights / biases.

    Returns (B, output_dim) in x.dtype."""
    B, input_dim = x.shape
    w1, b1 = params["w1"], params["b1"]   # (in, 2H), (1, 2H)
    w2, b2 = params["w2"], params["b2"]   # (2H, H), (1, H)
    w3, b3 = params["w3"], params["b3"]   # (H, out), (1, out)
    two_h, hid, out_dim = w1.shape[1], w2.shape[1], w3.shape[1]

    # ---- lane-dense padding of all feature dims (exact: zero padding is a
    # fixed point of this MLP since GELU(0) == 0) ----
    Kp = _round_up(input_dim, lane)
    H2p = _round_up(two_h, lane)
    Hp = _round_up(hid, lane)
    Op = _round_up(out_dim, lane)

    # ---- batch tiling: fixed-size row tiles, ragged batch padded up ----
    if tm is None:
        tm = min(256, _round_up(B, 8))
    tm = max(8, _round_up(int(tm), 8))
    Bp = _round_up(B, tm)
    grid = (Bp // tm,)

    out_dtype = x.dtype

    xp = _pad2d(x, Bp, Kp).astype(compute_dtype)
    w1p = _pad2d(w1, Kp, H2p).astype(compute_dtype)
    w2p = _pad2d(w2, H2p, Hp).astype(compute_dtype)
    w3p = _pad2d(w3, Hp, Op).astype(compute_dtype)
    # Biases stay f32 (added to the f32 accumulator).
    b1p = _pad2d(b1, 1, H2p).astype(jnp.float32)
    b2p = _pad2d(b2, 1, Hp).astype(jnp.float32)
    b3p = _pad2d(b3, 1, Op).astype(jnp.float32)

    full = lambda shape: pl.BlockSpec(shape, lambda i: (0, 0))

    # ---- VMEM budget (double-buffered in/out tiles + resident weights) ----
    csize = jnp.dtype(compute_dtype).itemsize
    osize = jnp.dtype(out_dtype).itemsize
    weight_bytes = (Kp * H2p + H2p * Hp + Hp * Op) * csize + (H2p + Hp + Op) * 4
    act_bytes = tm * Kp * csize + tm * Op * osize
    inter_bytes = tm * (H2p + Hp) * 4
    vmem_needed = 2 * act_bytes + 2 * weight_bytes + inter_bytes + (4 << 20)
    vmem_limit = int(min(max(vmem_needed, 32 << 20), 96 << 20))

    flops = 2 * Bp * (Kp * H2p + H2p * Hp + Hp * Op)
    transcendentals = Bp * (H2p + Hp)
    bytes_accessed = (Bp * Kp * csize + weight_bytes + Bp * Op * osize)

    out = pl.pallas_call(
        functools.partial(_mlp_kernel, approximate_gelu=approximate_gelu),
        out_shape=jax.ShapeDtypeStruct((Bp, Op), out_dtype),
        grid_spec=pltpu.PrefetchScalarGridSpec(
            num_scalar_prefetch=0,
            grid=grid,
            in_specs=[
                pl.BlockSpec((tm, Kp), lambda i: (i, 0)),  # x tile (rows i)
                full((Kp, H2p)),                           # w1 (resident)
                full((1, H2p)),                            # b1
                full((H2p, Hp)),                           # w2
                full((1, Hp)),                             # b2
                full((Hp, Op)),                            # w3
                full((1, Op)),                             # b3
            ],
            out_specs=pl.BlockSpec((tm, Op), lambda i: (i, 0)),
        ),
        compiler_params=pltpu.CompilerParams(
            dimension_semantics=("parallel",),   # shard batch tiles across TCs
            vmem_limit_bytes=vmem_limit,
        ),
        cost_estimate=pl.CostEstimate(
            flops=int(flops),
            transcendentals=int(transcendentals),
            bytes_accessed=int(bytes_accessed),
        ),
    )(xp, w1p, b1p, w2p, b2p, w3p, b3p)

    return out[:B, :out_dim]


def init_params(key, input_dim, hidden_dim, output_dim, dtype=jnp.float32):
    """Mimics nn.Linear's uniform(-1/sqrt(fan_in), 1/sqrt(fan_in)) init.

    Weights stored transposed: (in_dim, out_dim)."""
    ks = jax.random.split(key, 6)

    def linear(kw, kb, fan_in, fan_out):
        bound = 1.0 / math.sqrt(fan_in)
        w = jax.random.uniform(kw, (fan_in, fan_out), dtype, -bound, bound)
        b = jax.random.uniform(kb, (1, fan_out), dtype, -bound, bound)
        return w, b

    w1, b1 = linear(ks[0], ks[1], input_dim, 2 * hidden_dim)
    w2, b2 = linear(ks[2], ks[3], 2 * hidden_dim, hidden_dim)
    w3, b3 = linear(ks[4], ks[5], hidden_dim, output_dim)
    return {"w1": w1, "b1": b1, "w2": w2, "b2": b2, "w3": w3, "b3": b3}


def _reference(x, p, *, approximate_gelu=False):
    act = _gelu_tanh if approximate_gelu else _gelu_exact
    h = act(x @ p["w1"] + p["b1"])
    h = act(h @ p["w2"] + p["b2"])
    return h @ p["w3"] + p["b3"]


if __name__ == "__main__":
    key = jax.random.PRNGKey(0)
    k_x, k_p = jax.random.split(key)

    # Deliberately ragged, small shapes: exercises batch padding (260 -> 384),
    # a 3-step grid with tm=128, and 128-lane padding of 48/128/64/40.
    batch, input_dim, hidden_dim, output_dim = 260, 48, 64, 40
    x = jax.random.normal(k_x, (batch, input_dim), dtype=jnp.float32)
    params = init_params(k_p, input_dim, hidden_dim, output_dim)

    ref = _reference(x, params)

    # 1) f32 path, exact GELU: tight tolerance vs reference.
    out = large_molecule_encoder(x, params, tm=128)
    out = jax.block_until_ready(out)
    assert out.shape == (batch, output_dim)
    assert jnp.allclose(out, ref, atol=1e-4, rtol=1e-4)

    # 2) bf16 weights/activations (f32 accumulation + f32 GELU): loose tolerance.
    out_bf16 = large_molecule_encoder(x, params, tm=128,
                                      compute_dtype=jnp.bfloat16)
    out_bf16 = jax.block_until_ready(out_bf16)
    assert jnp.allclose(out_bf16, ref, atol=5e-2, rtol=5e-2)

    # 3) tanh-GELU variant (EUP path): close to exact GELU.
    out_tanh = large_molecule_encoder(x, params, tm=128, approximate_gelu=True)
    out_tanh = jax.block_until_ready(out_tanh)
    assert jnp.allclose(out_tanh, ref, atol=2e-2, rtol=2e-2)

    print("KERNEL_OK")
</pallas_src>

<mosaic_0001>
module attributes {stable_mosaic.version = 11 : i64} {
  func.func @_mlp_kernel(%arg0: i32, %arg1: memref<128x128xf32, #tpu.memory_space<vmem>>, %arg2: memref<128x128xf32, #tpu.memory_space<vmem>>, %arg3: memref<1x128xf32, #tpu.memory_space<vmem>>, %arg4: memref<128x128xf32, #tpu.memory_space<vmem>>, %arg5: memref<1x128xf32, #tpu.memory_space<vmem>>, %arg6: memref<128x128xf32, #tpu.memory_space<vmem>>, %arg7: memref<1x128xf32, #tpu.memory_space<vmem>>, %arg8: memref<128x128xf32, #tpu.memory_space<vmem>>) attributes {dimension_semantics = [#tpu.dimension_semantics<parallel>], iteration_bounds = array<i64: 3>, scalar_prefetch = 0 : i64, scratch_operands = 0 : i64, tpu.core_type = #tpu.core_type<tc>, window_params = [{transform_indices = @transform_0, window_bounds = array<i64: 128, 128>}, {pipeline_mode = #tpu.pipeline_mode<synchronous>, transform_indices = @transform_1, window_bounds = array<i64: 128, 128>}, {pipeline_mode = #tpu.pipeline_mode<synchronous>, transform_indices = @transform_2, window_bounds = array<i64: 1, 128>}, {pipeline_mode = #tpu.pipeline_mode<synchronous>, transform_indices = @transform_3, window_bounds = array<i64: 128, 128>}, {pipeline_mode = #tpu.pipeline_mode<synchronous>, transform_indices = @transform_4, window_bounds = array<i64: 1, 128>}, {pipeline_mode = #tpu.pipeline_mode<synchronous>, transform_indices = @transform_5, window_bounds = array<i64: 128, 128>}, {pipeline_mode = #tpu.pipeline_mode<synchronous>, transform_indices = @transform_6, window_bounds = array<i64: 1, 128>}, {transform_indices = @transform_7, window_bounds = array<i64: 128, 128>}]} {
    %c0 = arith.constant 0 : index
    %c0_0 = arith.constant 0 : index
    %0 = vector.load %arg1[%c0, %c0_0] : memref<128x128xf32, #tpu.memory_space<vmem>>, vector<128x128xf32>
    %c0_1 = arith.constant 0 : index
    %c0_2 = arith.constant 0 : index
    %1 = vector.load %arg2[%c0_1, %c0_2] : memref<128x128xf32, #tpu.memory_space<vmem>>, vector<128x128xf32>
    %cst = arith.constant dense<0.000000e+00> : vector<128x128xf32>
    %2 = tpu.matmul %0, %1, %cst {dimension_numbers = #tpu.dot_dimension_numbers<[1], [0], [0], [1], [0, 0, 1, 1], [], []>} : vector<128x128xf32>, vector<128x128xf32>, vector<128x128xf32> -> vector<128x128xf32>
    %c0_3 = arith.constant 0 : index
    %c0_4 = arith.constant 0 : index
    %3 = vector.load %arg3[%c0_3, %c0_4] : memref<1x128xf32, #tpu.memory_space<vmem>>, vector<1x128xf32>
    %4 = vector.broadcast %3 : vector<1x128xf32> to vector<128x128xf32>
    %5 = arith.addf %2, %4 : vector<128x128xf32>
    %cst_5 = arith.constant 5.000000e-01 : f32
    %6 = vector.broadcast %cst_5 : f32 to vector<128x128xf32>
    %7 = arith.mulf %6, %5 : vector<128x128xf32>
    %cst_6 = arith.constant 0.707106769 : f32
    %8 = vector.broadcast %cst_6 : f32 to vector<128x128xf32>
    %9 = arith.mulf %5, %8 : vector<128x128xf32>
    %10 = math.erf %9 : vector<128x128xf32>
    %cst_7 = arith.constant 1.000000e+00 : f32
    %11 = vector.broadcast %cst_7 : f32 to vector<128x128xf32>
    %12 = arith.addf %11, %10 : vector<128x128xf32>
    %13 = arith.mulf %7, %12 : vector<128x128xf32>
    %c0_8 = arith.constant 0 : index
    %c0_9 = arith.constant 0 : index
    %14 = vector.load %arg4[%c0_8, %c0_9] : memref<128x128xf32, #tpu.memory_space<vmem>>, vector<128x128xf32>
    %cst_10 = arith.constant dense<0.000000e+00> : vector<128x128xf32>
    %15 = tpu.matmul %13, %14, %cst_10 {dimension_numbers = #tpu.dot_dimension_numbers<[1], [0], [0], [1], [0, 0, 1, 1], [], []>} : vector<128x128xf32>, vector<128x128xf32>, vector<128x128xf32> -> vector<128x128xf32>
    %c0_11 = arith.constant 0 : index
    %c0_12 = arith.constant 0 : index
    %16 = vector.load %arg5[%c0_11, %c0_12] : memref<1x128xf32, #tpu.memory_space<vmem>>, vector<1x128xf32>
    %17 = vector.broadcast %16 : vector<1x128xf32> to vector<128x128xf32>
    %18 = arith.addf %15, %17 : vector<128x128xf32>
    %cst_13 = arith.constant 5.000000e-01 : f32
    %19 = vector.broadcast %cst_13 : f32 to vector<128x128xf32>
    %20 = arith.mulf %19, %18 : vector<128x128xf32>
    %cst_14 = arith.constant 0.707106769 : f32
    %21 = vector.broadcast %cst_14 : f32 to vector<128x128xf32>
    %22 = arith.mulf %18, %21 : vector<128x128xf32>
    %23 = math.erf %22 : vector<128x128xf32>
    %cst_15 = arith.constant 1.000000e+00 : f32
    %24 = vector.broadcast %cst_15 : f32 to vector<128x128xf32>
    %25 = arith.addf %24, %23 : vector<128x128xf32>
    %26 = arith.mulf %20, %25 : vector<128x128xf32>
    %c0_16 = arith.constant 0 : index
    %c0_17 = arith.constant 0 : index
    %27 = vector.load %arg6[%c0_16, %c0_17] : memref<128x128xf32, #tpu.memory_space<vmem>>, vector<128x128xf32>
    %cst_18 = arith.constant dense<0.000000e+00> : vector<128x128xf32>
    %28 = tpu.matmul %26, %27, %cst_18 {dimension_numbers = #tpu.dot_dimension_numbers<[1], [0], [0], [1], [0, 0, 1, 1], [], []>} : vector<128x128xf32>, vector<128x128xf32>, vector<128x128xf32> -> vector<128x128xf32>
    %c0_19 = arith.constant 0 : index
    %c0_20 = arith.constant 0 : index
    %29 = vector.load %arg7[%c0_19, %c0_20] : memref<1x128xf32, #tpu.memory_space<vmem>>, vector<1x128xf32>
    %30 = vector.broadcast %29 : vector<1x128xf32> to vector<128x128xf32>
    %31 = arith.addf %28, %30 : vector<128x128xf32>
    %c0_21 = arith.constant 0 : index
    %c0_22 = arith.constant 0 : index
    %32 = vector.load %arg8[%c0_21, %c0_22] : memref<128x128xf32, #tpu.memory_space<vmem>>, vector<128x128xf32>
    tpu.vector_store %arg8[%c0_21, %c0_22], %31 {strides = array<i32>} : memref<128x128xf32, #tpu.memory_space<vmem>>, vector<128x128xf32>,
    return
  }
  func.func @transform_0(%arg0: i32) -> (i32, i32) {
    %c0_i32 = arith.constant 0 : i32
    %c0_i32_0 = arith.constant 0 : i32
    return %arg0, %c0_i32 : i32, i32
  }
  func.func @transform_1(%arg0: i32) -> (i32, i32) {
    %c0_i32 = arith.constant 0 : i32
    %c0_i32_0 = arith.constant 0 : i32
    %c0_i32_1 = arith.constant 0 : i32
    return %c0_i32, %c0_i32_0 : i32, i32
  }
  func.func @transform_2(%arg0: i32) -> (i32, i32) {
    %c0_i32 = arith.constant 0 : i32
    %c0_i32_0 = arith.constant 0 : i32
    %c0_i32_1 = arith.constant 0 : i32
    return %c0_i32, %c0_i32_0 : i32, i32
  }
  func.func @transform_3(%arg0: i32) -> (i32, i32) {
    %c0_i32 = arith.constant 0 : i32
    %c0_i32_0 = arith.constant 0 : i32
    %c0_i32_1 = arith.constant 0 : i32
    return %c0_i32, %c0_i32_0 : i32, i32
  }
  func.func @transform_4(%arg0: i32) -> (i32, i32) {
    %c0_i32 = arith.constant 0 : i32
    %c0_i32_0 = arith.constant 0 : i32
    %c0_i32_1 = arith.constant 0 : i32
    return %c0_i32, %c0_i32_0 : i32, i32
  }
  func.func @transform_5(%arg0: i32) -> (i32, i32) {
    %c0_i32 = arith.constant 0 : i32
    %c0_i32_0 = arith.constant 0 : i32
    %c0_i32_1 = arith.constant 0 : i32
    return %c0_i32, %c0_i32_0 : i32, i32
  }
  func.func @transform_6(%arg0: i32) -> (i32, i32) {
    %c0_i32 = arith.constant 0 : i32
    %c0_i32_0 = arith.constant 0 : i32
    %c0_i32_1 = arith.constant 0 : i32
    return %c0_i32, %c0_i32_0 : i32, i32
  }
  func.func @transform_7(%arg0: i32) -> (i32, i32) {
    %c0_i32 = arith.constant 0 : i32
    %c0_i32_0 = arith.constant 0 : i32
    return %arg0, %c0_i32 : i32, i32
  }
}

</mosaic_0001>

<llo_original>
// kernel: tpu_custom_call.1
$region0: #{tpu_custom_call.1}
  #allocation0 [shape = 'u32[]', space=smem, size = 0x4, offset = 0x4, fixed_abs, tag = 'smem constant byte address 0x4 - core index']
  #allocation1 [shape = 'u32[144,128]{1,0:T(1,128)}', space=vmem, size = 0x12000, scoped, tag = 'internal scratch']
  %s0 = inlined_call_operand.hbm [shape: f32[384,128], index: 0, kind: input, shape index: {}]
  %s1 = inlined_call_operand.hbm [shape: f32[128,128], index: 1, kind: input, shape index: {}]
  %s2 = inlined_call_operand.vmem [shape: f32[1,128], index: 2, kind: input, shape index: {}]
  %s3 = inlined_call_operand.hbm [shape: f32[128,128], index: 3, kind: input, shape index: {}]
  %s4 = inlined_call_operand.vmem [shape: f32[1,128], index: 4, kind: input, shape index: {}]
  %s5 = inlined_call_operand.hbm [shape: f32[128,128], index: 5, kind: input, shape index: {}]
  %s6 = inlined_call_operand.vmem [shape: f32[1,128], index: 6, kind: input, shape index: {}]
  %s7 = inlined_call_operand.hbm [shape: f32[384,128], index: 7, kind: output, shape index: {}]
  %s8 = sld [smem:[#allocation0]]
  $region77: #{tpu_custom_call.1} parent=0
    _
  %s10 = ssub.s32 1, %s8
  %s11 = scalar_select 0, %s10, %s8
  $region1: #{tpu_custom_call.1} parent=0
    #allocation2 [shape = 'u8[131072]{0}', space=vmem, size = 0x20000, scoped, tag = 'input window, operand 0']
    #allocation3 [shape = 's32[2]{0}', space=sflag, size = 0x8, scoped, tag = 'scoped memory for tpu_custom_call.1']
    #allocation4 [shape = 's32[2]{0}', space=sflag, size = 0x8, scoped, tag = 'scoped memory for tpu_custom_call.1']
    #allocation5 [shape = 'u8[65536]{0}', space=vmem, size = 0x10000, scoped, tag = 'input window, operand 1, single buffered']
    #allocation6 [shape = 's32[1]{0}', space=sflag, size = 0x4, scoped, tag = 'scoped memory for tpu_custom_call.1']
    #allocation7 [shape = 'u8[65536]{0}', space=vmem, size = 0x10000, scoped, tag = 'input window, operand 3, single buffered']
    #allocation8 [shape = 'u8[65536]{0}', space=vmem, size = 0x10000, scoped, tag = 'input window, operand 5, single buffered']
    #allocation9 [shape = 's32[1]{0}', space=sflag, size = 0x4, scoped, tag = 'scoped memory for tpu_custom_call.1']
    #allocation10 [shape = 'u8[131072]{0}', space=vmem, size = 0x20000, scoped, tag = 'output window, operand 0']
    %12 = vsyncpa [#allocation3], 0
    %s13 = scalar_lea.sflag [#allocation3], 1
    %14 = vsyncpa %s13, 0
    %15 = vsyncpa [#allocation6], 0
    %16 = vsyncpa [#allocation9], 0
    %17 = vsyncpa [#allocation4], 0
    %s18 = scalar_lea.sflag [#allocation4], 1
    %19 = vsyncpa %s18, 0
    loop: start=0, step=1, limit=5
    $region2: #{tpu_custom_call.1} parent=1 // loop_pre_header
      _
    $region3: #{tpu_custom_call.1} parent=1 // loop_header
      %s21 = sphi 0, %s25
      %p22 = scmp.ge.s32.totalorder %s21, 5
      %s31 = sphi 0, %s33
      %s34 = sphi 0, %s31
      %s35 = sphi 0, %s34
      %s51 = sphi 0, %s35
      %s55 = sphi 0, %s55
      %s57 = sphi 0, %s55
      %s58 = sphi 0, %s57
      %s72 = sphi 0, %s58
      %s76 = sphi 0, %s76
      %s78 = sphi 0, %s76
      %s79 = sphi 0, %s78
      %s93 = sphi 0, %s79
      %s97 = sphi 0, %s97
      %s99 = sphi 0, %s97
      %s100 = sphi 0, %s99
      %s114 = sphi 0, %s100
      %s118 = sphi 0, %s118
      %s120 = sphi 0, %s118
      %s121 = sphi 0, %s120
      %s135 = sphi 0, %s121
      %s139 = sphi 0, %s139
      %s141 = sphi 0, %s139
      %s142 = sphi 0, %s141
      %s156 = sphi 0, %s142
      %s160 = sphi 0, %s160
      %s162 = sphi 0, %s160
      %s163 = sphi 0, %s162
      %s177 = sphi 0, %s163
      %s183 = sphi 0, %s185
      %s186 = sphi 0, %s183
      %s187 = sphi 0, %s186
      %s203 = sphi 0, %s187
    $region4: #{tpu_custom_call.1} parent=1 // loop_header_branch
      %24 = sbr.rel (%p22) target = $region8
    $region5: #{tpu_custom_call.1} parent=1 // loop_body
      %s26 = ssub.s32 %s21, 1
      %s27 = ssub.s32 %s21, 2
      %s28 = sadd.s32 %s21, 1
      %s29 = ssub.s32 %s21, %s28
      %p30 = scmp.eq.s32.totalorder %s29, 0
      %s32 = sadd.s32 %s31, 1
      %s33 = scalar_select %p30, %s31, %s32
      %p36 = pneg %p30
      %p37 = scmp.eq.s32.totalorder %s21, 2
      %p38 = por %p36, %p37
      %p39 = scmp.ne.s32.totalorder %s31, %s34
      %p40 = scmp.eq.s32.totalorder %s21, 0
      %p41 = por %p39, %p40
      %p42 = scmp.ne.s32.totalorder %s31, %s34
      %p43 = scmp.eq.s32.totalorder %s26, 2
      %p44 = por %p42, %p43
      %p45 = scmp.ne.s32.totalorder %s34, %s35
      %p46 = scmp.eq.s32.totalorder %s26, 0
      %p47 = por %p45, %p46
      %p48 = scmp.ne.s32.totalorder %s34, %s35
      %p49 = scmp.eq.s32.totalorder %s27, 2
      %p50 = por %p48, %p49
      %p52 = scmp.ne.s32.totalorder %s35, %s51
      %p53 = scmp.eq.s32.totalorder %s27, 0
      %p54 = por %p52, %p53
      %s56 = sadd.s32 %s55, 1
      %p59 = scmp.eq.s32.totalorder %s21, 2
      %p60 = scmp.ne.s32.totalorder %s55, %s57
      %p61 = scmp.eq.s32.totalorder %s21, 0
      %p62 = por %p60, %p61
      %p63 = scmp.ne.s32.totalorder %s55, %s57
      %p64 = scmp.eq.s32.totalorder %s26, 2
      %p65 = por %p63, %p64
      %p66 = scmp.ne.s32.totalorder %s57, %s58
      %p67 = scmp.eq.s32.totalorder %s26, 0
      %p68 = por %p66, %p67
      %p69 = scmp.ne.s32.totalorder %s57, %s58
      %p70 = scmp.eq.s32.totalorder %s27, 2
      %p71 = por %p69, %p70
      %p73 = scmp.ne.s32.totalorder %s58, %s72
      %p74 = scmp.eq.s32.totalorder %s27, 0
      %p75 = por %p73, %p74
      %s77 = sadd.s32 %s76, 1
      %p80 = scmp.eq.s32.totalorder %s21, 2
      %p81 = scmp.ne.s32.totalorder %s76, %s78
      %p82 = scmp.eq.s32.totalorder %s21, 0
      %p83 = por %p81, %p82
      %p84 = scmp.ne.s32.totalorder %s76, %s78
      %p85 = scmp.eq.s32.totalorder %s26, 2
      %p86 = por %p84, %p85
      %p87 = scmp.ne.s32.totalorder %s78, %s79
      %p88 = scmp.eq.s32.totalorder %s26, 0
      %p89 = por %p87, %p88
      %p90 = scmp.ne.s32.totalorder %s78, %s79
      %p91 = scmp.eq.s32.totalorder %s27, 2
      %p92 = por %p90, %p91
      %p94 = scmp.ne.s32.totalorder %s79, %s93
      %p95 = scmp.eq.s32.totalorder %s27, 0
      %p96 = por %p94, %p95
      %s98 = sadd.s32 %s97, 1
      %p101 = scmp.eq.s32.totalorder %s21, 2
      %p102 = scmp.ne.s32.totalorder %s97, %s99
      %p103 = scmp.eq.s32.totalorder %s21, 0
      %p104 = por %p102, %p103
      %p105 = scmp.ne.s32.totalorder %s97, %s99
      %p106 = scmp.eq.s32.totalorder %s26, 2
      %p107 = por %p105, %p106
      %p108 = scmp.ne.s32.totalorder %s99, %s100
      %p109 = scmp.eq.s32.totalorder %s26, 0
      %p110 = por %p108, %p109
      %p111 = scmp.ne.s32.totalorder %s99, %s100
      %p112 = scmp.eq.s32.totalorder %s27, 2
      %p113 = por %p111, %p112
      %p115 = scmp.ne.s32.totalorder %s100, %s114
      %p116 = scmp.eq.s32.totalorder %s27, 0
      %p117 = por %p115, %p116
      %s119 = sadd.s32 %s118, 1
      %p122 = scmp.eq.s32.totalorder %s21, 2
      %p123 = scmp.ne.s32.totalorder %s118, %s120
      %p124 = scmp.eq.s32.totalorder %s21, 0
      %p125 = por %p123, %p124
      %p126 = scmp.ne.s32.totalorder %s118, %s120
      %p127 = scmp.eq.s32.totalorder %s26, 2
      %p128 = por %p126, %p127
      %p129 = scmp.ne.s32.totalorder %s120, %s121
      %p130 = scmp.eq.s32.totalorder %s26, 0
      %p131 = por %p129, %p130
      %p132 = scmp.ne.s32.totalorder %s120, %s121
      %p133 = scmp.eq.s32.totalorder %s27, 2
      %p134 = por %p132, %p133
      %p136 = scmp.ne.s32.totalorder %s121, %s135
      %p137 = scmp.eq.s32.totalorder %s27, 0
      %p138 = por %p136, %p137
      %s140 = sadd.s32 %s139, 1
      %p143 = scmp.eq.s32.totalorder %s21, 2
      %p144 = scmp.ne.s32.totalorder %s139, %s141
      %p145 = scmp.eq.s32.totalorder %s21, 0
      %p146 = por %p144, %p145
      %p147 = scmp.ne.s32.totalorder %s139, %s141
      %p148 = scmp.eq.s32.totalorder %s26, 2
      %p149 = por %p147, %p148
      %p150 = scmp.ne.s32.totalorder %s141, %s142
      %p151 = scmp.eq.s32.totalorder %s26, 0
      %p152 = por %p150, %p151
      %p153 = scmp.ne.s32.totalorder %s141, %s142
      %p154 = scmp.eq.s32.totalorder %s27, 2
      %p155 = por %p153, %p154
      %p157 = scmp.ne.s32.totalorder %s142, %s156
      %p158 = scmp.eq.s32.totalorder %s27, 0
      %p159 = por %p157, %p158
      %s161 = sadd.s32 %s160, 1
      %p164 = scmp.eq.s32.totalorder %s21, 2
      %p165 = scmp.ne.s32.totalorder %s160, %s162
      %p166 = scmp.eq.s32.totalorder %s21, 0
      %p167 = por %p165, %p166
      %p168 = scmp.ne.s32.totalorder %s160, %s162
      %p169 = scmp.eq.s32.totalorder %s26, 2
      %p170 = por %p168, %p169
      %p171 = scmp.ne.s32.totalorder %s162, %s163
      %p172 = scmp.eq.s32.totalorder %s26, 0
      %p173 = por %p171, %p172
      %p174 = scmp.ne.s32.totalorder %s162, %s163
      %p175 = scmp.eq.s32.totalorder %s27, 2
      %p176 = por %p174, %p175
      %p178 = scmp.ne.s32.totalorder %s163, %s177
      %p179 = scmp.eq.s32.totalorder %s27, 0
      %p180 = por %p178, %p179
      %s181 = ssub.s32 %s21, %s28
      %p182 = scmp.eq.s32.totalorder %s181, 0
      %s184 = sadd.s32 %s183, 1
      %s185 = scalar_select %p182, %s183, %s184
      %p188 = pneg %p182
      %p189 = scmp.eq.s32.totalorder %s21, 2
      %p190 = por %p188, %p189
      %p191 = scmp.ne.s32.totalorder %s183, %s186
      %p192 = scmp.eq.s32.totalorder %s21, 0
      %p193 = por %p191, %p192
      %p194 = scmp.ne.s32.totalorder %s183, %s186
      %p195 = scmp.eq.s32.totalorder %s26, 2
      %p196 = por %p194, %p195
      %p197 = scmp.ne.s32.totalorder %s186, %s187
      %p198 = scmp.eq.s32.totalorder %s26, 0
      %p199 = por %p197, %p198
      %p200 = scmp.ne.s32.totalorder %s186, %s187
      %p201 = scmp.eq.s32.totalorder %s27, 2
      %p202 = por %p200, %p201
      %p204 = scmp.ne.s32.totalorder %s187, %s203
      %p205 = scmp.eq.s32.totalorder %s27, 0
      %p206 = por %p204, %p205
      %p207 = scmp.le.s32.totalorder 1, %s21
      %p208 = scmp.lt.s32.totalorder %s21, 4
      %p209 = pnand %p207, %p208
      %p210 = pneg %p209
      // Predicated region
      $region9: #{tpu_custom_call.1} parent=5 // pred_check
        _
      $region10: #{tpu_custom_call.1} parent=5 // pred_check_branch
        %212 = sbr.rel (%p209) target = $region12
      $region11: #{tpu_custom_call.1} parent=5 // pred_region
        %s213 = ssub.s32 %s21, 1
        // Predicated region
        $region13: #{tpu_custom_call.1} parent=11 // pred_check
          %p214 = pneg %p68
        $region14: #{tpu_custom_call.1} parent=11 // pred_check_branch
          %216 = sbr.rel (%p214) target = $region16
        $region15: #{tpu_custom_call.1} parent=11 // pred_region
          %s218 = ssub.s32 2048, 2048
          %219 = vsyncadd [#allocation6], %s218
          %s220 = sshll.u32 [#allocation5], 4
          %s221 = int_to_ptr.vmem [resolvable:$true] %s220
          %226 = dma.hbm_to_vmem [thread:$0]  %s1, 2048, %s221, [#allocation6], 128, 128, 8
        $region16: #{tpu_custom_call.1} parent=11 // pred_fallthru
          _
        // Predicated region
        $region17: #{tpu_custom_call.1} parent=11 // pred_check
          %p227 = pneg %p89
        $region18: #{tpu_custom_call.1} parent=11 // pred_check_branch
          %229 = sbr.rel (%p227) target = $region20
        $region19: #{tpu_custom_call.1} parent=11 // pred_region
          _
        $region20: #{tpu_custom_call.1} parent=11 // pred_fallthru
          _
        // Predicated region
        $region21: #{tpu_custom_call.1} parent=11 // pred_check
          %p230 = pneg %p110
        $region22: #{tpu_custom_call.1} parent=11 // pred_check_branch
          %232 = sbr.rel (%p230) target = $region24
        $region23: #{tpu_custom_call.1} parent=11 // pred_region
          %s234 = ssub.s32 2048, 2048
          %235 = vsyncadd [#allocation6], %s234
          %s236 = sshll.u32 [#allocation7], 4
          %s237 = int_to_ptr.vmem [resolvable:$true] %s236
          %242 = dma.hbm_to_vmem [thread:$0]  %s3, 2048, %s237, [#allocation6], 128, 128, 8
        $region24: #{tpu_custom_call.1} parent=11 // pred_fallthru
          _
        // Predicated region
        $region25: #{tpu_custom_call.1} parent=11 // pred_check
          %p243 = pneg %p131
        $region26: #{tpu_custom_call.1} parent=11 // pred_check_branch
          %245 = sbr.rel (%p243) target = $region28
        $region27: #{tpu_custom_call.1} parent=11 // pred_region
          _
        $region28: #{tpu_custom_call.1} parent=11 // pred_fallthru
          _
        // Predicated region
        $region29: #{tpu_custom_call.1} parent=11 // pred_check
          %p246 = pneg %p152
        $region30: #{tpu_custom_call.1} parent=11 // pred_check_branch
          %248 = sbr.rel (%p246) target = $region32
        $region31: #{tpu_custom_call.1} parent=11 // pred_region
          %s250 = ssub.s32 2048, 2048
          %251 = vsyncadd [#allocation9], %s250
          %s252 = sshll.u32 [#allocation8], 4
          %s253 = int_to_ptr.vmem [resolvable:$true] %s252
          %258 = dma.hbm_to_vmem [thread:$0]  %s5, 2048, %s253, [#allocation9], 128, 128, 8
        $region32: #{tpu_custom_call.1} parent=11 // pred_fallthru
          _
        // Predicated region
        $region33: #{tpu_custom_call.1} parent=11 // pred_check
          %p259 = pneg %p173
        $region34: #{tpu_custom_call.1} parent=11 // pred_check_branch
          %261 = sbr.rel (%p259) target = $region36
        $region35: #{tpu_custom_call.1} parent=11 // pred_region
          _
        $region36: #{tpu_custom_call.1} parent=11 // pred_fallthru
          _
      $region12: #{tpu_custom_call.1} parent=5 // pred_fallthru
        _
      %p262 = scmp.lt.s32.totalorder %s21, 3
      // Predicated region
      $region37: #{tpu_custom_call.1} parent=5 // pred_check
        %p263 = pneg %p262
      $region38: #{tpu_custom_call.1} parent=5 // pred_check_branch
        %265 = sbr.rel (%p263) target = $region40
      $region39: #{tpu_custom_call.1} parent=5 // pred_region
        // Predicated region
        $region41: #{tpu_custom_call.1} parent=39 // pred_check
          %p266 = pneg %p41
        $region42: #{tpu_custom_call.1} parent=39 // pred_check_branch
          %268 = sbr.rel (%p266) target = $region44
        $region43: #{tpu_custom_call.1} parent=39 // pred_region
          %s269 = sand.u32 %s31, 1
          %s270 = scalar_lea.sflag [#allocation3], %s269
          %s271 = sand.u32 %s31, 1
          %s272 = smul.addr %s271, 128
          %s273 = scalar_lea.vmem [#allocation2], %s272
          %s274 = smul.u32 16, %s21
          %s276 = ssub.s32 2048, 2048
          %277 = vsyncadd %s270, %s276
          %s278 = smul.addr %s274, 128
          %s279 = scalar_lea.hbm %s0, %s278
          %s280 = sshll.u32 %s273, 4
          %s281 = int_to_ptr.vmem [resolvable:$true] %s280
          %286 = dma.hbm_to_vmem [thread:$0]  %s279, 2048, %s281, %s270, 128, 128, 8
        $region44: #{tpu_custom_call.1} parent=39 // pred_fallthru
          _
      $region40: #{tpu_custom_call.1} parent=5 // pred_fallthru
        _
      %p287 = scmp.le.s32.totalorder 1, %s21
      %p288 = scmp.lt.s32.totalorder %s21, 4
      %p289 = pnand %p287, %p288
      %p290 = pneg %p289
      // Predicated region
      $region45: #{tpu_custom_call.1} parent=5 // pred_check
        _
      $region46: #{tpu_custom_call.1} parent=5 // pred_check_branch
        %292 = sbr.rel (%p289) target = $region48
      $region47: #{tpu_custom_call.1} parent=5 // pred_region
        %s293 = ssub.s32 %s21, 1
        %s294 = sand.u32 %s34, 1
        %s295 = scalar_lea.sflag [#allocation3], %s294
        %s296 = sand.u32 %s34, 1
        %s297 = smul.addr %s296, 128
        %s298 = scalar_lea.vmem [#allocation2], %s297
        // Predicated region
        $region49: #{tpu_custom_call.1} parent=47 // pred_check
          %p299 = pneg %p47
        $region50: #{tpu_custom_call.1} parent=47 // pred_check_branch
          %301 = sbr.rel (%p299) target = $region52
        $region51: #{tpu_custom_call.1} parent=47 // pred_region
          %302 = dma.done %s295, 2048
        $region52: #{tpu_custom_call.1} parent=47 // pred_fallthru
          _
        // Predicated region
        $region53: #{tpu_custom_call.1} parent=47 // pred_check
          %p303 = pneg %p68
        $region54: #{tpu_custom_call.1} parent=47 // pred_check_branch
          %305 = sbr.rel (%p303) target = $region56
        $region55: #{tpu_custom_call.1} parent=47 // pred_region
          %306 = dma.done [#allocation6], 2048
        $region56: #{tpu_custom_call.1} parent=47 // pred_fallthru
          _
        // Predicated region
        $region57: #{tpu_custom_call.1} parent=47 // pred_check
          %p307 = pneg %p110
        $region58: #{tpu_custom_call.1} parent=47 // pred_check_branch
          %309 = sbr.rel (%p307) target = $region60
        $region59: #{tpu_custom_call.1} parent=47 // pred_region
          %310 = dma.done [#allocation6], 2048
        $region60: #{tpu_custom_call.1} parent=47 // pred_fallthru
          _
        // Predicated region
        $region61: #{tpu_custom_call.1} parent=47 // pred_check
          %p311 = pneg %p152
        $region62: #{tpu_custom_call.1} parent=47 // pred_check_branch
          %313 = sbr.rel (%p311) target = $region64
        $region63: #{tpu_custom_call.1} parent=47 // pred_region
          %314 = dma.done [#allocation9], 2048
        $region64: #{tpu_custom_call.1} parent=47 // pred_fallthru
          _
        %s315 = sand.u32 %s34, 1
        %s316 = scalar_lea.sflag [#allocation3], %s315
        %s317 = sand.u32 %s34, 1
        %s318 = smul.addr %s317, 128
        %s319 = scalar_lea.vmem [#allocation2], %s318
        %p320 = pneg %p47
        %p321 = pneg %p44
        %p322 = pneg %p68
        %p323 = pneg %p65
        %p324 = pneg %p89
        %p325 = pneg %p86
        %p326 = pneg %p110
        %p327 = pneg %p107
        %p328 = pneg %p131
        %p329 = pneg %p128
        %p330 = pneg %p152
        %p331 = pneg %p149
        %p332 = pneg %p173
        %p333 = pneg %p170
        %p334 = pneg %p199
        %p335 = pneg %p196
        %s336 = sand.u32 %s186, 1
        %s337 = scalar_lea.sflag [#allocation4], %s336
        %s338 = sand.u32 %s186, 1
        %s339 = smul.addr %s338, 128
        %s340 = scalar_lea.vmem [#allocation10], %s339
        %s341 = smul.u32 16, %s26
        %s342 = smul.u32 16, %s26
        %v343 = vld [vmem:[%s298] sm:$0xff]
        %v344 = vld [vmem:[%s298 + $0x8] sm:$0xff]
        %v345 = vld [vmem:[%s298 + $0x10] sm:$0xff]
        %v346 = vld [vmem:[%s298 + $0x18] sm:$0xff]
        %v347 = vld [vmem:[%s298 + $0x20] sm:$0xff]
        %v348 = vld [vmem:[%s298 + $0x28] sm:$0xff]
        %v349 = vld [vmem:[%s298 + $0x30] sm:$0xff]
        %v350 = vld [vmem:[%s298 + $0x38] sm:$0xff]
        %v351 = vld [vmem:[%s298 + $0x40] sm:$0xff]
        %v352 = vld [vmem:[%s298 + $0x48] sm:$0xff]
        %v353 = vld [vmem:[%s298 + $0x50] sm:$0xff]
        %v354 = vld [vmem:[%s298 + $0x58] sm:$0xff]
        %v355 = vld [vmem:[%s298 + $0x60] sm:$0xff]
        %v356 = vld [vmem:[%s298 + $0x68] sm:$0xff]
        %v357 = vld [vmem:[%s298 + $0x70] sm:$0xff]
        %v358 = vld [vmem:[%s298 + $0x78] sm:$0xff]
        %v359 = vld [vmem:[#allocation5] sm:$0xff]
        %v360 = vld [vmem:[#allocation5 + $0x8] sm:$0xff]
        %v361 = vld [vmem:[#allocation5 + $0x10] sm:$0xff]
        %v362 = vld [vmem:[#allocation5 + $0x18] sm:$0xff]
        %v363 = vld [vmem:[#allocation5 + $0x20] sm:$0xff]
        %v364 = vld [vmem:[#allocation5 + $0x28] sm:$0xff]
        %v365 = vld [vmem:[#allocation5 + $0x30] sm:$0xff]
        %v366 = vld [vmem:[#allocation5 + $0x38] sm:$0xff]
        %v367 = vld [vmem:[#allocation5 + $0x40] sm:$0xff]
        %v368 = vld [vmem:[#allocation5 + $0x48] sm:$0xff]
        %v369 = vld [vmem:[#allocation5 + $0x50] sm:$0xff]
        %v370 = vld [vmem:[#allocation5 + $0x58] sm:$0xff]
        %v371 = vld [vmem:[#allocation5 + $0x60] sm:$0xff]
        %v372 = vld [vmem:[#allocation5 + $0x68] sm:$0xff]
        %v373 = vld [vmem:[#allocation5 + $0x70] sm:$0xff]
        %v374 = vld [vmem:[#allocation5 + $0x78] sm:$0xff]
        %v375 = vld [vmem:[%s2] sm:$0x1]
        %v377 = vlaneseq
        %v378 = vshrl.u32 %v377, 7
        %v379 = vsub.s32 0, %v378
        %v380 = vrot.slane %v375, %v379
        %382 = vmatprep.subr.mxu0 0.0
        %383 = vmatpush1.msra.mxu0 %v359
        %384 = vmatprep.subr.mxu0 0.0
        %385 = vmatpush1.msra.mxu0 %v360
        %386 = vmatprep.subr.mxu0 0.0
        %387 = vmatpush1.msra.mxu0 %v361
        %388 = vmatprep.subr.mxu0 0.0
        %389 = vmatpush1.msra.mxu0 %v362
        %390 = vmatprep.subr.mxu0 0.0
        %391 = vmatpush1.msra.mxu0 %v363
        %392 = vmatprep.subr.mxu0 0.0
        %393 = vmatpush1.msra.mxu0 %v364
        %394 = vmatprep.subr.mxu0 0.0
        %395 = vmatpush1.msra.mxu0 %v365
        %396 = vmatprep.subr.mxu0 0.0
        %397 = vmatpush1.msra.mxu0 %v366
        %398 = vmatprep.subr.mxu0 0.0
        %399 = vmatpush1.msra.mxu0 %v367
        %400 = vmatprep.subr.mxu0 0.0
        %401 = vmatpush1.msra.mxu0 %v368
        %402 = vmatprep.subr.mxu0 0.0
        %403 = vmatpush1.msra.mxu0 %v369
        %404 = vmatprep.subr.mxu0 0.0
        %405 = vmatpush1.msra.mxu0 %v370
        %406 = vmatprep.subr.mxu0 0.0
        %407 = vmatpush1.msra.mxu0 %v371
        %408 = vmatprep.subr.mxu0 0.0
        %409 = vmatpush1.msra.mxu0 %v372
        %410 = vmatprep.subr.mxu0 0.0
        %411 = vmatpush1.msra.mxu0 %v373
        %412 = vmatprep.subr.mxu0 0.0
        %413 = vmatpush1.msra.mxu0 %v374
        %414 = vmatprep.subr.mxu0 0.0
        %415 = vmatpush1.msra.mxu0 0.0
        %416 = vmatprep.subr.mxu0 0.0
        %417 = vmatpush1.msra.mxu0 0.0
        %418 = vmatprep.subr.mxu0 0.0
        %419 = vmatpush1.msra.mxu0 0.0
        %420 = vmatprep.subr.mxu0 0.0
        %421 = vmatpush1.msra.mxu0 0.0
        %422 = vmatprep.subr.mxu0 0.0
        %423 = vmatpush1.msra.mxu0 0.0
        %424 = vmatprep.subr.mxu0 0.0
        %425 = vmatpush1.msra.mxu0 0.0
        %426 = vmatprep.subr.mxu0 0.0
        %427 = vmatpush1.msra.mxu0 0.0
        %428 = vmatprep.subr.mxu0 0.0
        %429 = vmatpush1.msra.mxu0 0.0
        %430 = vmatprep.subr.mxu0 0.0
        %431 = vmatpush1.msra.mxu0 0.0
        %432 = vmatprep.subr.mxu0 0.0
        %433 = vmatpush1.msra.mxu0 0.0
        %434 = vmatprep.subr.mxu0 0.0
        %435 = vmatpush1.msra.mxu0 0.0
        %436 = vmatprep.subr.mxu0 0.0
        %437 = vmatpush1.msra.mxu0 0.0
        %438 = vmatprep.subr.mxu0 0.0
        %439 = vmatpush1.msra.mxu0 0.0
        %440 = vmatprep.subr.mxu0 0.0
        %441 = vmatpush1.msra.mxu0 0.0
        %442 = vmatprep.subr.mxu0 0.0
        %443 = vmatpush1.msra.mxu0 0.0
        %444 = vmatprep.subr.mxu0 0.0
        %445 = vmatpush1.msra.mxu0 0.0
        %446 = vmatprep.mubr.f32.mxu0 0.0
        %447 = vmatmul.mubr.f32.gmra.mrb[0].mxu0 %v343
        %v448 = vpop.f32.mrb[0].mxu0
        %v449 = vadd.f32 %v380, %v448
        %v450 = vpop.f32.mrb[0].mxu0
        %451 = vmatprep.mubr.f32.mxu0 0.0
        %452 = vmatmul.mubr.f32.gmra.mrb[0].mxu0 %v344
        %v453 = vpop.f32.mrb[0].mxu0
        %v454 = vadd.f32 %v380, %v453
        %v455 = vpop.f32.mrb[0].mxu0
        %456 = vmatprep.mubr.f32.mxu0 0.0
        %457 = vmatmul.mubr.f32.gmra.mrb[0].mxu0 %v345
        %v458 = vpop.f32.mrb[0].mxu0
        %v459 = vadd.f32 %v380, %v458
        %v460 = vpop.f32.mrb[0].mxu0
        %461 = vmatprep.mubr.f32.mxu0 0.0
        %462 = vmatmul.mubr.f32.gmra.mrb[0].mxu0 %v346
        %v463 = vpop.f32.mrb[0].mxu0
        %v464 = vadd.f32 %v380, %v463
        %v465 = vpop.f32.mrb[0].mxu0
        %466 = vmatprep.mubr.f32.mxu0 0.0
        %467 = vmatmul.mubr.f32.gmra.mrb[0].mxu0 %v347
        %v468 = vpop.f32.mrb[0].mxu0
        %v469 = vadd.f32 %v380, %v468
        %v470 = vpop.f32.mrb[0].mxu0
        %471 = vmatprep.mubr.f32.mxu0 0.0
        %472 = vmatmul.mubr.f32.gmra.mrb[0].mxu0 %v348
        %v473 = vpop.f32.mrb[0].mxu0
        %v474 = vadd.f32 %v380, %v473
        %v475 = vpop.f32.mrb[0].mxu0
        %476 = vmatprep.mubr.f32.mxu0 0.0
        %477 = vmatmul.mubr.f32.gmra.mrb[0].mxu0 %v349
        %v478 = vpop.f32.mrb[0].mxu0
        %v479 = vadd.f32 %v380, %v478
        %v480 = vpop.f32.mrb[0].mxu0
        %481 = vmatprep.mubr.f32.mxu0 0.0
        %482 = vmatmul.mubr.f32.gmra.mrb[0].mxu0 %v350
        %v483 = vpop.f32.mrb[0].mxu0
        %v484 = vadd.f32 %v380, %v483
        %v485 = vpop.f32.mrb[0].mxu0
        %486 = vmatprep.mubr.f32.mxu0 0.0
        %487 = vmatmul.mubr.f32.gmra.mrb[0].mxu0 %v351
        %v488 = vpop.f32.mrb[0].mxu0
        %v489 = vadd.f32 %v380, %v488
        %v490 = vpop.f32.mrb[0].mxu0
        %491 = vmatprep.mubr.f32.mxu0 0.0
        %492 = vmatmul.mubr.f32.gmra.mrb[0].mxu0 %v352
        %v493 = vpop.f32.mrb[0].mxu0
        %v494 = vadd.f32 %v380, %v493
        %v495 = vpop.f32.mrb[0].mxu0
        %496 = vmatprep.mubr.f32.mxu0 0.0
        %497 = vmatmul.mubr.f32.gmra.mrb[0].mxu0 %v353
        %v498 = vpop.f32.mrb[0].mxu0
        %v499 = vadd.f32 %v380, %v498
        %v500 = vpop.f32.mrb[0].mxu0
        %501 = vmatprep.mubr.f32.mxu0 0.0
        %502 = vmatmul.mubr.f32.gmra.mrb[0].mxu0 %v354
        %v503 = vpop.f32.mrb[0].mxu0
        %v504 = vadd.f32 %v380, %v503
        %v505 = vpop.f32.mrb[0].mxu0
        %506 = vmatprep.mubr.f32.mxu0 0.0
        %507 = vmatmul.mubr.f32.gmra.mrb[0].mxu0 %v355
        %v508 = vpop.f32.mrb[0].mxu0
        %v509 = vadd.f32 %v380, %v508
        %v510 = vpop.f32.mrb[0].mxu0
        %511 = vmatprep.mubr.f32.mxu0 0.0
        %512 = vmatmul.mubr.f32.gmra.mrb[0].mxu0 %v356
        %v513 = vpop.f32.mrb[0].mxu0
        %v514 = vadd.f32 %v380, %v513
        %v515 = vpop.f32.mrb[0].mxu0
        %516 = vmatprep.mubr.f32.mxu0 0.0
        %517 = vmatmul.mubr.f32.gmra.mrb[0].mxu0 %v357
        %v518 = vpop.f32.mrb[0].mxu0
        %v519 = vadd.f32 %v380, %v518
        %v520 = vpop.f32.mrb[0].mxu0
        %521 = vmatprep.mubr.f32.mxu0 0.0
        %522 = vmatmul.mubr.f32.gmra.mrb[0].mxu0 %v358
        %v523 = vpop.f32.mrb[0].mxu0
        %v524 = vadd.f32 %v380, %v523
        %v525 = vpop.f32.mrb[0].mxu0
        %526 = vdwg.mxu0
        %v527 = vmul.f32 %v449, 0.5
        %v528 = vmul.f32 %v454, 0.5
        %v529 = vmul.f32 %v459, 0.5
        %v530 = vmul.f32 %v464, 0.5
        %v531 = vmul.f32 %v469, 0.5
        %v532 = vmul.f32 %v474, 0.5
        %v533 = vmul.f32 %v479, 0.5
        %v534 = vmul.f32 %v484, 0.5
        %v535 = vmul.f32 %v489, 0.5
        %v536 = vmul.f32 %v494, 0.5
        %v537 = vmul.f32 %v499, 0.5
        %v538 = vmul.f32 %v504, 0.5
        %v539 = vmul.f32 %v509, 0.5
        %v540 = vmul.f32 %v514, 0.5
        %v541 = vmul.f32 %v519, 0.5
        %v542 = vmul.f32 %v524, 0.5
        %v543 = vmul.f32 %v449, 0.70710677
        %v544 = vmul.f32 %v454, 0.70710677
        %v545 = vmul.f32 %v459, 0.70710677
        %v546 = vmul.f32 %v464, 0.70710677
        %v547 = vmul.f32 %v469, 0.70710677
        %v548 = vmul.f32 %v474, 0.70710677
        %v549 = vmul.f32 %v479, 0.70710677
        %v550 = vmul.f32 %v484, 0.70710677
        %v551 = vmul.f32 %v489, 0.70710677
        %v552 = vmul.f32 %v494, 0.70710677
        %v553 = vmul.f32 %v499, 0.70710677
        %v554 = vmul.f32 %v504, 0.70710677
        %v555 = vmul.f32 %v509, 0.70710677
        %v556 = vmul.f32 %v514, 0.70710677
        %v557 = vmul.f32 %v519, 0.70710677
        %v558 = vmul.f32 %v524, 0.70710677
        %v559 = verf.f32.pop %v543
        %v560 = verf.f32.pop %v544
        %v561 = verf.f32.pop %v545
        %v562 = verf.f32.pop %v546
        %v563 = verf.f32.pop %v547
        %v564 = verf.f32.pop %v548
        %v565 = verf.f32.pop %v549
        %v566 = verf.f32.pop %v550
        %v567 = verf.f32.pop %v551
        %v568 = verf.f32.pop %v552
        %v569 = verf.f32.pop %v553
        %v570 = verf.f32.pop %v554
        %v571 = verf.f32.pop %v555
        %v572 = verf.f32.pop %v556
        %v573 = verf.f32.pop %v557
        %v574 = verf.f32.pop %v558
        %v575 = vadd.f32 %v559, 1.0
        %v576 = vadd.f32 %v560, 1.0
        %v577 = vadd.f32 %v561, 1.0
        %v578 = vadd.f32 %v562, 1.0
        %v579 = vadd.f32 %v563, 1.0
        %v580 = vadd.f32 %v564, 1.0
        %v581 = vadd.f32 %v565, 1.0
        %v582 = vadd.f32 %v566, 1.0
        %v583 = vadd.f32 %v567, 1.0
        %v584 = vadd.f32 %v568, 1.0
        %v585 = vadd.f32 %v569, 1.0
        %v586 = vadd.f32 %v570, 1.0
        %v587 = vadd.f32 %v571, 1.0
        %v588 = vadd.f32 %v572, 1.0
        %v589 = vadd.f32 %v573, 1.0
        %v590 = vadd.f32 %v574, 1.0
        %v591 = vmul.f32 %v527, %v575
        %v592 = vmul.f32 %v528, %v576
        %v593 = vmul.f32 %v529, %v577
        %v594 = vmul.f32 %v530, %v578
        %v595 = vmul.f32 %v531, %v579
        %v596 = vmul.f32 %v532, %v580
        %v597 = vmul.f32 %v533, %v581
        %v598 = vmul.f32 %v534, %v582
        %v599 = vmul.f32 %v535, %v583
        %v600 = vmul.f32 %v536, %v584
        %v601 = vmul.f32 %v537, %v585
        %v602 = vmul.f32 %v538, %v586
        %v603 = vmul.f32 %v539, %v587
        %v604 = vmul.f32 %v540, %v588
        %v605 = vmul.f32 %v541, %v589
        %v606 = vmul.f32 %v542, %v590
        %v607 = vld [vmem:[#allocation7] sm:$0xff]
        %v608 = vld [vmem:[#allocation7 + $0x8] sm:$0xff]
        %v609 = vld [vmem:[#allocation7 + $0x10] sm:$0xff]
        %v610 = vld [vmem:[#allocation7 + $0x18] sm:$0xff]
        %v611 = vld [vmem:[#allocation7 + $0x20] sm:$0xff]
        %v612 = vld [vmem:[#allocation7 + $0x28] sm:$0xff]
        %v613 = vld [vmem:[#allocation7 + $0x30] sm:$0xff]
        %v614 = vld [vmem:[#allocation7 + $0x38] sm:$0xff]
        %v615 = vld [vmem:[#allocation7 + $0x40] sm:$0xff]
        %v616 = vld [vmem:[#allocation7 + $0x48] sm:$0xff]
        %v617 = vld [vmem:[#allocation7 + $0x50] sm:$0xff]
        %v618 = vld [vmem:[#allocation7 + $0x58] sm:$0xff]
        %v619 = vld [vmem:[#allocation7 + $0x60] sm:$0xff]
        %v620 = vld [vmem:[#allocation7 + $0x68] sm:$0xff]
        %v621 = vld [vmem:[#allocation7 + $0x70] sm:$0xff]
        %v622 = vld [vmem:[#allocation7 + $0x78] sm:$0xff]
        %v623 = vld [vmem:[%s4] sm:$0x1]
        %v625 = vlaneseq
        %v626 = vshrl.u32 %v625, 7
        %v627 = vsub.s32 0, %v626
        %v628 = vrot.slane %v623, %v627
        %630 = vmatprep.subr.mxu0 0.0
        %631 = vmatpush1.msra.mxu0 %v607
        %632 = vmatprep.subr.mxu0 0.0
        %633 = vmatpush1.msra.mxu0 %v608
        %634 = vmatprep.subr.mxu0 0.0
        %635 = vmatpush1.msra.mxu0 %v609
        %636 = vmatprep.subr.mxu0 0.0
        %637 = vmatpush1.msra.mxu0 %v610
        %638 = vmatprep.subr.mxu0 0.0
        %639 = vmatpush1.msra.mxu0 %v611
        %640 = vmatprep.subr.mxu0 0.0
        %641 = vmatpush1.msra.mxu0 %v612
        %642 = vmatprep.subr.mxu0 0.0
        %643 = vmatpush1.msra.mxu0 %v613
        %644 = vmatprep.subr.mxu0 0.0
        %645 = vmatpush1.msra.mxu0 %v614
        %646 = vmatprep.subr.mxu0 0.0
        %647 = vmatpush1.msra.mxu0 %v615
        %648 = vmatprep.subr.mxu0 0.0
        %649 = vmatpush1.msra.mxu0 %v616
        %650 = vmatprep.subr.mxu0 0.0
        %651 = vmatpush1.msra.mxu0 %v617
        %652 = vmatprep.subr.mxu0 0.0
        %653 = vmatpush1.msra.mxu0 %v618
        %654 = vmatprep.subr.mxu0 0.0
        %655 = vmatpush1.msra.mxu0 %v619
        %656 = vmatprep.subr.mxu0 0.0
        %657 = vmatpush1.msra.mxu0 %v620
        %658 = vmatprep.subr.mxu0 0.0
        %659 = vmatpush1.msra.mxu0 %v621
        %660 = vmatprep.subr.mxu0 0.0
        %661 = vmatpush1.msra.mxu0 %v622
        %662 = vmatprep.subr.mxu0 0.0
        %663 = vmatpush1.msra.mxu0 0.0
        %664 = vmatprep.subr.mxu0 0.0
        %665 = vmatpush1.msra.mxu0 0.0
        %666 = vmatprep.subr.mxu0 0.0
        %667 = vmatpush1.msra.mxu0 0.0
        %668 = vmatprep.subr.mxu0 0.0
        %669 = vmatpush1.msra.mxu0 0.0
        %670 = vmatprep.subr.mxu0 0.0
        %671 = vmatpush1.msra.mxu0 0.0
        %672 = vmatprep.subr.mxu0 0.0
        %673 = vmatpush1.msra.mxu0 0.0
        %674 = vmatprep.subr.mxu0 0.0
        %675 = vmatpush1.msra.mxu0 0.0
        %676 = vmatprep.subr.mxu0 0.0
        %677 = vmatpush1.msra.mxu0 0.0
        %678 = vmatprep.subr.mxu0 0.0
        %679 = vmatpush1.msra.mxu0 0.0
        %680 = vmatprep.subr.mxu0 0.0
        %681 = vmatpush1.msra.mxu0 0.0
        %682 = vmatprep.subr.mxu0 0.0
        %683 = vmatpush1.msra.mxu0 0.0
        %684 = vmatprep.subr.mxu0 0.0
        %685 = vmatpush1.msra.mxu0 0.0
        %686 = vmatprep.subr.mxu0 0.0
        %687 = vmatpush1.msra.mxu0 0.0
        %688 = vmatprep.subr.mxu0 0.0
        %689 = vmatpush1.msra.mxu0 0.0
        %690 = vmatprep.subr.mxu0 0.0
        %691 = vmatpush1.msra.mxu0 0.0
        %692 = vmatprep.subr.mxu0 0.0
        %693 = vmatpush1.msra.mxu0 0.0
        %694 = vmatprep.mubr.f32.mxu0 0.0
        %695 = vmatmul.mubr.f32.gmra.mrb[0].mxu0 %v591
        %v696 = vpop.f32.mrb[0].mxu0
        %v697 = vadd.f32 %v628, %v696
        %v698 = vpop.f32.mrb[0].mxu0
        %699 = vmatprep.mubr.f32.mxu0 0.0
        %700 = vmatmul.mubr.f32.gmra.mrb[0].mxu0 %v592
        %v701 = vpop.f32.mrb[0].mxu0
        %v702 = vadd.f32 %v628, %v701
        %v703 = vpop.f32.mrb[0].mxu0
        %704 = vmatprep.mubr.f32.mxu0 0.0
        %705 = vmatmul.mubr.f32.gmra.mrb[0].mxu0 %v593
        %v706 = vpop.f32.mrb[0].mxu0
        %v707 = vadd.f32 %v628, %v706
        %v708 = vpop.f32.mrb[0].mxu0
        %709 = vmatprep.mubr.f32.mxu0 0.0
        %710 = vmatmul.mubr.f32.gmra.mrb[0].mxu0 %v594
        %v711 = vpop.f32.mrb[0].mxu0
        %v712 = vadd.f32 %v628, %v711
        %v713 = vpop.f32.mrb[0].mxu0
        %714 = vmatprep.mubr.f32.mxu0 0.0
        %715 = vmatmul.mubr.f32.gmra.mrb[0].mxu0 %v595
        %v716 = vpop.f32.mrb[0].mxu0
        %v717 = vadd.f32 %v628, %v716
        %v718 = vpop.f32.mrb[0].mxu0
        %719 = vmatprep.mubr.f32.mxu0 0.0
        %720 = vmatmul.mubr.f32.gmra.mrb[0].mxu0 %v596
        %v721 = vpop.f32.mrb[0].mxu0
        %v722 = vadd.f32 %v628, %v721
        %v723 = vpop.f32.mrb[0].mxu0
        %724 = vmatprep.mubr.f32.mxu0 0.0
        %725 = vmatmul.mubr.f32.gmra.mrb[0].mxu0 %v597
        %v726 = vpop.f32.mrb[0].mxu0
        %v727 = vadd.f32 %v628, %v726
        %v728 = vpop.f32.mrb[0].mxu0
        %729 = vmatprep.mubr.f32.mxu0 0.0
        %730 = vmatmul.mubr.f32.gmra.mrb[0].mxu0 %v598
        %v731 = vpop.f32.mrb[0].mxu0
        %v732 = vadd.f32 %v628, %v731
        %v733 = vpop.f32.mrb[0].mxu0
        %734 = vmatprep.mubr.f32.mxu0 0.0
        %735 = vmatmul.mubr.f32.gmra.mrb[0].mxu0 %v599
        %v736 = vpop.f32.mrb[0].mxu0
        %v737 = vadd.f32 %v628, %v736
        %v738 = vpop.f32.mrb[0].mxu0
        %739 = vmatprep.mubr.f32.mxu0 0.0
        %740 = vmatmul.mubr.f32.gmra.mrb[0].mxu0 %v600
        %v741 = vpop.f32.mrb[0].mxu0
        %v742 = vadd.f32 %v628, %v741
        %v743 = vpop.f32.mrb[0].mxu0
        %744 = vmatprep.mubr.f32.mxu0 0.0
        %745 = vmatmul.mubr.f32.gmra.mrb[0].mxu0 %v601
        %v746 = vpop.f32.mrb[0].mxu0
        %v747 = vadd.f32 %v628, %v746
        %v748 = vpop.f32.mrb[0].mxu0
        %749 = vmatprep.mubr.f32.mxu0 0.0
        %750 = vmatmul.mubr.f32.gmra.mrb[0].mxu0 %v602
        %v751 = vpop.f32.mrb[0].mxu0
        %v752 = vadd.f32 %v628, %v751
        %v753 = vpop.f32.mrb[0].mxu0
        %754 = vmatprep.mubr.f32.mxu0 0.0
        %755 = vmatmul.mubr.f32.gmra.mrb[0].mxu0 %v603
        %v756 = vpop.f32.mrb[0].mxu0
        %v757 = vadd.f32 %v628, %v756
        %v758 = vpop.f32.mrb[0].mxu0
        %759 = vmatprep.mubr.f32.mxu0 0.0
        %760 = vmatmul.mubr.f32.gmra.mrb[0].mxu0 %v604
        %v761 = vpop.f32.mrb[0].mxu0
        %v762 = vadd.f32 %v628, %v761
        %v763 = vpop.f32.mrb[0].mxu0
        %764 = vmatprep.mubr.f32.mxu0 0.0
        %765 = vmatmul.mubr.f32.gmra.mrb[0].mxu0 %v605
        %v766 = vpop.f32.mrb[0].mxu0
        %v767 = vadd.f32 %v628, %v766
        %v768 = vpop.f32.mrb[0].mxu0
        %769 = vmatprep.mubr.f32.mxu0 0.0
        %770 = vmatmul.mubr.f32.gmra.mrb[0].mxu0 %v606
        %v771 = vpop.f32.mrb[0].mxu0
        %v772 = vadd.f32 %v628, %v771
        %v773 = vpop.f32.mrb[0].mxu0
        %774 = vdwg.mxu0
        %v775 = vmul.f32 %v697, 0.5
        %v776 = vmul.f32 %v702, 0.5
        %v777 = vmul.f32 %v707, 0.5
        %v778 = vmul.f32 %v712, 0.5
        %v779 = vmul.f32 %v717, 0.5
        %v780 = vmul.f32 %v722, 0.5
        %v781 = vmul.f32 %v727, 0.5
        %v782 = vmul.f32 %v732, 0.5
        %v783 = vmul.f32 %v737, 0.5
        %v784 = vmul.f32 %v742, 0.5
        %v785 = vmul.f32 %v747, 0.5
        %v786 = vmul.f32 %v752, 0.5
        %v787 = vmul.f32 %v757, 0.5
        %v788 = vmul.f32 %v762, 0.5
        %v789 = vmul.f32 %v767, 0.5
        %v790 = vmul.f32 %v772, 0.5
        %v791 = vmul.f32 %v697, 0.70710677
        %v792 = vmul.f32 %v702, 0.70710677
        %v793 = vmul.f32 %v707, 0.70710677
        %v794 = vmul.f32 %v712, 0.70710677
        %v795 = vmul.f32 %v717, 0.70710677
        %v796 = vmul.f32 %v722, 0.70710677
        %v797 = vmul.f32 %v727, 0.70710677
        %v798 = vmul.f32 %v732, 0.70710677
        %v799 = vmul.f32 %v737, 0.70710677
        %v800 = vmul.f32 %v742, 0.70710677
        %v801 = vmul.f32 %v747, 0.70710677
        %v802 = vmul.f32 %v752, 0.70710677
        %v803 = vmul.f32 %v757, 0.70710677
        %v804 = vmul.f32 %v762, 0.70710677
        %v805 = vmul.f32 %v767, 0.70710677
        %v806 = vmul.f32 %v772, 0.70710677
        %v807 = verf.f32.pop %v791
        %v808 = verf.f32.pop %v792
        %v809 = verf.f32.pop %v793
        %v810 = verf.f32.pop %v794
        %v811 = verf.f32.pop %v795
        %v812 = verf.f32.pop %v796
        %v813 = verf.f32.pop %v797
        %v814 = verf.f32.pop %v798
        %v815 = verf.f32.pop %v799
        %v816 = verf.f32.pop %v800
        %v817 = verf.f32.pop %v801
        %v818 = verf.f32.pop %v802
        %v819 = verf.f32.pop %v803
        %v820 = verf.f32.pop %v804
        %v821 = verf.f32.pop %v805
        %v822 = verf.f32.pop %v806
        %v823 = vadd.f32 %v807, 1.0
        %v824 = vadd.f32 %v808, 1.0
        %v825 = vadd.f32 %v809, 1.0
        %v826 = vadd.f32 %v810, 1.0
        %v827 = vadd.f32 %v811, 1.0
        %v828 = vadd.f32 %v812, 1.0
        %v829 = vadd.f32 %v813, 1.0
        %v830 = vadd.f32 %v814, 1.0
        %v831 = vadd.f32 %v815, 1.0
        %v832 = vadd.f32 %v816, 1.0
        %v833 = vadd.f32 %v817, 1.0
        %v834 = vadd.f32 %v818, 1.0
        %v835 = vadd.f32 %v819, 1.0
        %v836 = vadd.f32 %v820, 1.0
        %v837 = vadd.f32 %v821, 1.0
        %v838 = vadd.f32 %v822, 1.0
        %v839 = vmul.f32 %v775, %v823
        %v840 = vmul.f32 %v776, %v824
        %v841 = vmul.f32 %v777, %v825
        %v842 = vmul.f32 %v778, %v826
        %v843 = vmul.f32 %v779, %v827
        %v844 = vmul.f32 %v780, %v828
        %v845 = vmul.f32 %v781, %v829
        %v846 = vmul.f32 %v782, %v830
        %v847 = vmul.f32 %v783, %v831
        %v848 = vmul.f32 %v784, %v832
        %v849 = vmul.f32 %v785, %v833
        %v850 = vmul.f32 %v786, %v834
        %v851 = vmul.f32 %v787, %v835
        %v852 = vmul.f32 %v788, %v836
        %v853 = vmul.f32 %v789, %v837
        %v854 = vmul.f32 %v790, %v838
        %v855 = vld [vmem:[#allocation8] sm:$0xff]
        %v856 = vld [vmem:[#allocation8 + $0x8] sm:$0xff]
        %v857 = vld [vmem:[#allocation8 + $0x10] sm:$0xff]
        %v858 = vld [vmem:[#allocation8 + $0x18] sm:$0xff]
        %v859 = vld [vmem:[#allocation8 + $0x20] sm:$0xff]
        %v860 = vld [vmem:[#allocation8 + $0x28] sm:$0xff]
        %v861 = vld [vmem:[#allocation8 + $0x30] sm:$0xff]
        %v862 = vld [vmem:[#allocation8 + $0x38] sm:$0xff]
        %v863 = vld [vmem:[#allocation8 + $0x40] sm:$0xff]
        %v864 = vld [vmem:[#allocation8 + $0x48] sm:$0xff]
        %v865 = vld [vmem:[#allocation8 + $0x50] sm:$0xff]
        %v866 = vld [vmem:[#allocation8 + $0x58] sm:$0xff]
        %v867 = vld [vmem:[#allocation8 + $0x60] sm:$0xff]
        %v868 = vld [vmem:[#allocation8 + $0x68] sm:$0xff]
        %v869 = vld [vmem:[#allocation8 + $0x70] sm:$0xff]
        %v870 = vld [vmem:[#allocation8 + $0x78] sm:$0xff]
        %v871 = vld [vmem:[%s6] sm:$0x1]
        %v873 = vlaneseq
        %v874 = vshrl.u32 %v873, 7
        %v875 = vsub.s32 0, %v874
        %v876 = vrot.slane %v871, %v875
        %878 = vmatprep.subr.mxu0 0.0
        %879 = vmatpush1.msra.mxu0 %v855
        %880 = vmatprep.subr.mxu0 0.0
        %881 = vmatpush1.msra.mxu0 %v856
        %882 = vmatprep.subr.mxu0 0.0
        %883 = vmatpush1.msra.mxu0 %v857
        %884 = vmatprep.subr.mxu0 0.0
        %885 = vmatpush1.msra.mxu0 %v858
        %886 = vmatprep.subr.mxu0 0.0
        %887 = vmatpush1.msra.mxu0 %v859
        %888 = vmatprep.subr.mxu0 0.0
        %889 = vmatpush1.msra.mxu0 %v860
        %890 = vmatprep.subr.mxu0 0.0
        %891 = vmatpush1.msra.mxu0 %v861
        %892 = vmatprep.subr.mxu0 0.0
        %893 = vmatpush1.msra.mxu0 %v862
        %894 = vmatprep.subr.mxu0 0.0
        %895 = vmatpush1.msra.mxu0 %v863
        %896 = vmatprep.subr.mxu0 0.0
        %897 = vmatpush1.msra.mxu0 %v864
        %898 = vmatprep.subr.mxu0 0.0
        %899 = vmatpush1.msra.mxu0 %v865
        %900 = vmatprep.subr.mxu0 0.0
        %901 = vmatpush1.msra.mxu0 %v866
        %902 = vmatprep.subr.mxu0 0.0
        %903 = vmatpush1.msra.mxu0 %v867
        %904 = vmatprep.subr.mxu0 0.0
        %905 = vmatpush1.msra.mxu0 %v868
        %906 = vmatprep.subr.mxu0 0.0
        %907 = vmatpush1.msra.mxu0 %v869
        %908 = vmatprep.subr.mxu0 0.0
        %909 = vmatpush1.msra.mxu0 %v870
        %910 = vmatprep.subr.mxu0 0.0
        %911 = vmatpush1.msra.mxu0 0.0
        %912 = vmatprep.subr.mxu0 0.0
        %913 = vmatpush1.msra.mxu0 0.0
        %914 = vmatprep.subr.mxu0 0.0
        %915 = vmatpush1.msra.mxu0 0.0
        %916 = vmatprep.subr.mxu0 0.0
        %917 = vmatpush1.msra.mxu0 0.0
        %918 = vmatprep.subr.mxu0 0.0
        %919 = vmatpush1.msra.mxu0 0.0
        %920 = vmatprep.subr.mxu0 0.0
        %921 = vmatpush1.msra.mxu0 0.0
        %922 = vmatprep.subr.mxu0 0.0
        %923 = vmatpush1.msra.mxu0 0.0
        %924 = vmatprep.subr.mxu0 0.0
        %925 = vmatpush1.msra.mxu0 0.0
        %926 = vmatprep.subr.mxu0 0.0
        %927 = vmatpush1.msra.mxu0 0.0
        %928 = vmatprep.subr.mxu0 0.0
        %929 = vmatpush1.msra.mxu0 0.0
        %930 = vmatprep.subr.mxu0 0.0
        %931 = vmatpush1.msra.mxu0 0.0
        %932 = vmatprep.subr.mxu0 0.0
        %933 = vmatpush1.msra.mxu0 0.0
        %934 = vmatprep.subr.mxu0 0.0
        %935 = vmatpush1.msra.mxu0 0.0
        %936 = vmatprep.subr.mxu0 0.0
        %937 = vmatpush1.msra.mxu0 0.0
        %938 = vmatprep.subr.mxu0 0.0
        %939 = vmatpush1.msra.mxu0 0.0
        %940 = vmatprep.subr.mxu0 0.0
        %941 = vmatpush1.msra.mxu0 0.0
        %942 = vmatprep.mubr.f32.mxu0 0.0
        %943 = vmatmul.mubr.f32.gmra.mrb[0].mxu0 %v839
        %v944 = vpop.f32.mrb[0].mxu0
        %v945 = vadd.f32 %v876, %v944
        %v946 = vpop.f32.mrb[0].mxu0
        %947 = vmatprep.mubr.f32.mxu0 0.0
        %948 = vmatmul.mubr.f32.gmra.mrb[0].mxu0 %v840
        %v949 = vpop.f32.mrb[0].mxu0
        %v950 = vadd.f32 %v876, %v949
        %v951 = vpop.f32.mrb[0].mxu0
        %952 = vmatprep.mubr.f32.mxu0 0.0
        %953 = vmatmul.mubr.f32.gmra.mrb[0].mxu0 %v841
        %v954 = vpop.f32.mrb[0].mxu0
        %v955 = vadd.f32 %v876, %v954
        %v956 = vpop.f32.mrb[0].mxu0
        %957 = vmatprep.mubr.f32.mxu0 0.0
        %958 = vmatmul.mubr.f32.gmra.mrb[0].mxu0 %v842
        %v959 = vpop.f32.mrb[0].mxu0
        %v960 = vadd.f32 %v876, %v959
        %v961 = vpop.f32.mrb[0].mxu0
        %962 = vmatprep.mubr.f32.mxu0 0.0
        %963 = vmatmul.mubr.f32.gmra.mrb[0].mxu0 %v843
        %v964 = vpop.f32.mrb[0].mxu0
        %v965 = vadd.f32 %v876, %v964
        %v966 = vpop.f32.mrb[0].mxu0
        %967 = vmatprep.mubr.f32.mxu0 0.0
        %968 = vmatmul.mubr.f32.gmra.mrb[0].mxu0 %v844
        %v969 = vpop.f32.mrb[0].mxu0
        %v970 = vadd.f32 %v876, %v969
        %v971 = vpop.f32.mrb[0].mxu0
        %972 = vmatprep.mubr.f32.mxu0 0.0
        %973 = vmatmul.mubr.f32.gmra.mrb[0].mxu0 %v845
        %v974 = vpop.f32.mrb[0].mxu0
        %v975 = vadd.f32 %v876, %v974
        %v976 = vpop.f32.mrb[0].mxu0
        %977 = vmatprep.mubr.f32.mxu0 0.0
        %978 = vmatmul.mubr.f32.gmra.mrb[0].mxu0 %v846
        %v979 = vpop.f32.mrb[0].mxu0
        %v980 = vadd.f32 %v876, %v979
        %v981 = vpop.f32.mrb[0].mxu0
        %982 = vmatprep.mubr.f32.mxu0 0.0
        %983 = vmatmul.mubr.f32.gmra.mrb[0].mxu0 %v847
        %v984 = vpop.f32.mrb[0].mxu0
        %v985 = vadd.f32 %v876, %v984
        %v986 = vpop.f32.mrb[0].mxu0
        %987 = vmatprep.mubr.f32.mxu0 0.0
        %988 = vmatmul.mubr.f32.gmra.mrb[0].mxu0 %v848
        %v989 = vpop.f32.mrb[0].mxu0
        %v990 = vadd.f32 %v876, %v989
        %v991 = vpop.f32.mrb[0].mxu0
        %992 = vmatprep.mubr.f32.mxu0 0.0
        %993 = vmatmul.mubr.f32.gmra.mrb[0].mxu0 %v849
        %v994 = vpop.f32.mrb[0].mxu0
        %v995 = vadd.f32 %v876, %v994
        %v996 = vpop.f32.mrb[0].mxu0
        %997 = vmatprep.mubr.f32.mxu0 0.0
        %998 = vmatmul.mubr.f32.gmra.mrb[0].mxu0 %v850
        %v999 = vpop.f32.mrb[0].mxu0
        %v1000 = vadd.f32 %v876, %v999
        %v1001 = vpop.f32.mrb[0].mxu0
        %1002 = vmatprep.mubr.f32.mxu0 0.0
        %1003 = vmatmul.mubr.f32.gmra.mrb[0].mxu0 %v851
        %v1004 = vpop.f32.mrb[0].mxu0
        %v1005 = vadd.f32 %v876, %v1004
        %v1006 = vpop.f32.mrb[0].mxu0
        %1007 = vmatprep.mubr.f32.mxu0 0.0
        %1008 = vmatmul.mubr.f32.gmra.mrb[0].mxu0 %v852
        %v1009 = vpop.f32.mrb[0].mxu0
        %v1010 = vadd.f32 %v876, %v1009
        %v1011 = vpop.f32.mrb[0].mxu0
        %1012 = vmatprep.mubr.f32.mxu0 0.0
        %1013 = vmatmul.mubr.f32.gmra.mrb[0].mxu0 %v853
        %v1014 = vpop.f32.mrb[0].mxu0
        %v1015 = vadd.f32 %v876, %v1014
        %v1016 = vpop.f32.mrb[0].mxu0
        %1017 = vmatprep.mubr.f32.mxu0 0.0
        %1018 = vmatmul.mubr.f32.gmra.mrb[0].mxu0 %v854
        %v1019 = vpop.f32.mrb[0].mxu0
        %v1020 = vadd.f32 %v876, %v1019
        %v1021 = vpop.f32.mrb[0].mxu0
        %1022 = vdwg.mxu0
        %1023 = vst [vmem:[%s340] sm:$0xff] %v945
        %1024 = vst [vmem:[%s340 + $0x8] sm:$0xff] %v950
        %1025 = vst [vmem:[%s340 + $0x10] sm:$0xff] %v955
        %1026 = vst [vmem:[%s340 + $0x18] sm:$0xff] %v960
        %1027 = vst [vmem:[%s340 + $0x20] sm:$0xff] %v965
        %1028 = vst [vmem:[%s340 + $0x28] sm:$0xff] %v970
        %1029 = vst [vmem:[%s340 + $0x30] sm:$0xff] %v975
        %1030 = vst [vmem:[%s340 + $0x38] sm:$0xff] %v980
        %1031 = vst [vmem:[%s340 + $0x40] sm:$0xff] %v985
        %1032 = vst [vmem:[%s340 + $0x48] sm:$0xff] %v990
        %1033 = vst [vmem:[%s340 + $0x50] sm:$0xff] %v995
        %1034 = vst [vmem:[%s340 + $0x58] sm:$0xff] %v1000
        %1035 = vst [vmem:[%s340 + $0x60] sm:$0xff] %v1005
        %1036 = vst [vmem:[%s340 + $0x68] sm:$0xff] %v1010
        %1037 = vst [vmem:[%s340 + $0x70] sm:$0xff] %v1015
        %1038 = vst [vmem:[%s340 + $0x78] sm:$0xff] %v1020
        %s1039 = sand.u32 %s186, 1
        %s1040 = scalar_lea.sflag [#allocation4], %s1039
        %s1041 = sand.u32 %s186, 1
        %s1042 = smul.addr %s1041, 128
        %s1043 = scalar_lea.vmem [#allocation10], %s1042
        // Predicated region
        $region65: #{tpu_custom_call.1} parent=47 // pred_check
          %p1044 = pneg %p196
        $region66: #{tpu_custom_call.1} parent=47 // pred_check_branch
          %1046 = sbr.rel (%p1044) target = $region68
        $region67: #{tpu_custom_call.1} parent=47 // pred_region
          %s1047 = smul.u32 16, %s26
          %s1049 = ssub.s32 2048, 2048
          %1050 = vsyncadd %s1040, %s1049
          %s1051 = smul.addr %s1047, 128
          %s1052 = scalar_lea.hbm %s7, %s1051
          %s1053 = sshll.u32 %s1043, 4
          %s1054 = int_to_ptr.vmem [resolvable:$true] %s1053
          %1059 = dma.vmem_to_hbm [thread:$0]  %s1054, 2048, %s1052, %s1040, 128, 128, 8
        $region68: #{tpu_custom_call.1} parent=47 // pred_fallthru
          _
      $region48: #{tpu_custom_call.1} parent=5 // pred_fallthru
        _
      %p1060 = scmp.le.s32.totalorder 2, %s21
      // Predicated region
      $region69: #{tpu_custom_call.1} parent=5 // pred_check
        %p1061 = pneg %p1060
      $region70: #{tpu_custom_call.1} parent=5 // pred_check_branch
        %1063 = sbr.rel (%p1061) target = $region72
      $region71: #{tpu_custom_call.1} parent=5 // pred_region
        %s1064 = ssub.s32 %s21, 2
        // Predicated region
        $region73: #{tpu_custom_call.1} parent=71 // pred_check
          %p1065 = pneg %p202
        $region74: #{tpu_custom_call.1} parent=71 // pred_check_branch
          %1067 = sbr.rel (%p1065) target = $region76
        $region75: #{tpu_custom_call.1} parent=71 // pred_region
          %s1068 = sand.u32 %s187, 1
          %s1069 = scalar_lea.sflag [#allocation4], %s1068
          %s1070 = sand.u32 %s187, 1
          %s1071 = smul.addr %s1070, 128
          %s1072 = scalar_lea.vmem [#allocation10], %s1071
          %1073 = dma.done %s1069, 2048
        $region76: #{tpu_custom_call.1} parent=71 // pred_fallthru
          _
      $region72: #{tpu_custom_call.1} parent=5 // pred_fallthru
        _
    $region6: #{tpu_custom_call.1} parent=1 // loop_footer
      %s25 = sadd.s32 1, %s21
    $region7: #{tpu_custom_call.1} parent=1 // loop_footer_branch
      %20 = sbr.rel target = $region3
    $region8: #{tpu_custom_call.1} parent=1 // loop_exit
      _
    %1074 = vsyncpa [#allocation3], 1
    %s1075 = scalar_lea.sflag [#allocation3], 1
    %1076 = vsyncpa %s1075, 1
    %1077 = vsyncpa [#allocation6], 1
    %1078 = vsyncpa [#allocation9], 1
    %1079 = vsyncpa [#allocation4], 1
    %s1080 = scalar_lea.sflag [#allocation4], 1
    %1081 = vsyncpa %s1080, 1

</llo_original>
